<compile_context>
chip_gen: v6e
topology: v6e:2x2x1
jax: 0.10.0
libtpu: 0.0.40
codegen_flags: <defaults>
</compile_context>

<pallas_src>
import functools

import jax
import jax.numpy as jnp
from jax.experimental import pallas as pl
from jax.experimental.pallas import tpu as pltpu


def _ulip_branch_kernel(scale_ref, pc_ref, oth_ref, out_ref, *, mm_dtype):
    """One contrastive branch per grid program.

    program 0: pc <-> text   (forward CE + reverse CE + pc->text accuracy)
    program 1: pc <-> image  (forward CE + reverse CE + pc->image accuracy)
    """
    scale = scale_ref[0, 0]
    eps_sq = jnp.float32(1e-24)  # (F.normalize eps = 1e-12) ** 2

    def inv_norm(x):
        # x / max(||x||, eps) == x * rsqrt(max(||x||^2, eps^2))  -- EUP rsqrt,
        # no divide, identical clamp semantics.
        return jax.lax.rsqrt(
            jnp.maximum(jnp.sum(x * x, axis=-1, keepdims=True), eps_sq))

    pc = pc_ref[...].astype(jnp.float32)
    oth = oth_ref[...].astype(jnp.float32)

    # Fold logit_scale into the pc normalization multiplier (applied AFTER the
    # L2 norm, preserving F.normalize eps semantics).  Cast to the MXU dtype
    # exactly once so neither operand is re-converted per matmul and the raw
    # f32 loads are dead from here on.
    pc_mm = (pc * (scale * inv_norm(pc))).astype(mm_dtype)
    oth_mm = (oth * inv_norm(oth)).astype(mm_dtype)

    B = pc.shape[0]
    inv_b = jnp.float32(1.0 / B)
    dn = (((1,), (1,)), ((), ()))  # contract feature dim of both operands (A @ B.T)

    def matmul(a, b):
        return jax.lax.dot_general(a, b, dn, preferred_element_type=jnp.float32)

    def row_ce(logits, diag):
        m = jnp.max(logits, axis=-1, keepdims=True)
        lse = m + jnp.log(jnp.sum(jnp.exp(logits - m), axis=-1, keepdims=True))
        return jnp.sum(lse - diag) * inv_b, m

    # Identity mask from a (B,1) vs (1,B) iota broadcast-compare (one
    # short-lived (B,B) bool).  The diagonal is extracted from the MXU result
    # itself so the accuracy comparison (diag >= row max) is bit-consistent
    # with the row max.
    ri = jax.lax.broadcasted_iota(jnp.int32, (B, 1), 0)
    ci = jax.lax.broadcasted_iota(jnp.int32, (1, B), 1)
    eye = ri == ci

    # forward: pc -> other   (logit_scale already folded into pc_mm)
    l_fwd = matmul(pc_mm, oth_mm)
    diag = jnp.sum(jnp.where(eye, l_fwd, 0.0), axis=-1, keepdims=True)
    ce_fwd, row_max = row_ce(l_fwd, diag)
    # TODO(synk): torch.argmax first-max tie-breaking is not reproduced; a tie
    # on the diagonal counts as correct here (metric-only, no effect on loss).
    acc = 100.0 * jnp.sum((diag >= row_max).astype(jnp.float32)) * inv_b

    # reverse: other -> pc (== CE(l_fwd.T)).  Its own MXU matmul keeps every
    # softmax reduction on the lane axis (no XLU sublane reduce); the
    # diagonal is shared with the forward direction.
    l_rev = matmul(oth_mm, pc_mm)
    ce_rev, _ = row_ce(l_rev, diag)

    branch_loss = 0.5 * (ce_fwd + ce_rev)

    # Lane-dense (8,128) output tile: row 0 lane 0 = branch loss, lane 1 = acc.
    lane = jax.lax.broadcasted_iota(jnp.int32, (8, 128), 1)
    sub = jax.lax.broadcasted_iota(jnp.int32, (8, 128), 0)
    row0 = sub == 0
    out = jnp.where(row0 & (lane == 0), branch_loss, 0.0)
    out = jnp.where(row0 & (lane == 1), acc, out)
    out_ref[...] = out


def _pad_lanes(x, d_padded):
    d = x.shape[-1]
    if d == d_padded:
        return x
    return jnp.pad(x, ((0, 0), (0, d_padded - d)))


def _vmem_limit_bytes():
    # ~25% headroom for Mosaic internal scratch / IO buffers: ~48 MiB on v7x
    # (64 MiB physical) instead of the whole core; on v5e/v6e (128 MiB) this
    # raises the default scoped limit, which helps larger B.
    cap = 64 * 1024 * 1024
    try:
        cap = int(pltpu.get_tpu_info().vmem_capacity_bytes)
    except Exception:
        pass
    return (cap * 3) // 4


def ulip_with_image_loss(pc_embed, text_embed, image_embed, logit_scale,
                         *, use_bf16_matmul=False):
    """Single-device ULIPWithImageLoss.forward.

    utils.all_gather_batch -> identity, utils.get_rank() -> 0, so
    labels = arange(local_batch_size).  (The module's label caching across
    calls is a host-side optimization with no numerical effect.)

    Note: B is used as-is (full-extent block).  B that is a multiple of the
    sublane tile (8 for f32) is fastest; B is NOT zero-padded here because
    padded columns would need -inf masking to keep the softmax denominators
    correct.
    """
    B, D = pc_embed.shape
    # Lane-dense feature dim (zero padding changes neither norms nor dots).
    Dp = max(128, ((D + 127) // 128) * 128)
    pc = _pad_lanes(pc_embed, Dp)
    others = jnp.stack(
        [_pad_lanes(text_embed, Dp), _pad_lanes(image_embed, Dp)], axis=0)

    in_dtypes = {jnp.dtype(pc_embed.dtype), jnp.dtype(text_embed.dtype),
                 jnp.dtype(image_embed.dtype)}
    if use_bf16_matmul or in_dtypes == {jnp.dtype(jnp.bfloat16)}:
        mm_dtype = jnp.bfloat16  # bf16-native MXU path (f32 accumulation)
    else:
        mm_dtype = jnp.float32

    scale = jnp.reshape(jnp.asarray(logit_scale, jnp.float32), (1, 1))

    itemsize = jnp.dtype(pc_embed.dtype).itemsize
    cost = pl.CostEstimate(
        flops=int(8 * B * B * Dp + 6 * B * Dp),        # 4 matmuls + norms
        transcendentals=int(4 * B * B + 8 * B),        # exp passes (+ log/rsqrt)
        bytes_accessed=int(3 * B * Dp * itemsize + 2 * 8 * 128 * 4),
    )

    kernel = functools.partial(_ulip_branch_kernel, mm_dtype=mm_dtype)

    out = pl.pallas_call(
        kernel,
        out_shape=jax.ShapeDtypeStruct((2, 8, 128), jnp.float32),
        grid=(2,),  # program 0: text branch, program 1: image branch
        in_specs=[
            pl.BlockSpec(memory_space=pltpu.MemorySpace.SMEM),     # logit_scale
            pl.BlockSpec((B, Dp), lambda i: (0, 0)),               # pc (resident)
            pl.BlockSpec((None, B, Dp), lambda i: (i, 0, 0)),      # text / image
        ],
        out_specs=pl.BlockSpec((None, 8, 128), lambda i: (i, 0, 0)),
        compiler_params=pltpu.CompilerParams(
            dimension_semantics=("parallel",),     # branch split -> 2nd TC on v7x
            vmem_limit_bytes=_vmem_limit_bytes(),
        ),
        cost_estimate=cost,
    )(scale, pc, others)

    loss = out[0, 0, 0] + out[1, 0, 0]
    return {
        "loss": loss,
        "ulip_loss": loss,
        "ulip_pc_image_acc": out[1, 0, 1],
        "ulip_pc_text_acc": out[0, 0, 1],
    }


def _reference(pc, tx, im, scale):
    """Pure-JAX reference mirroring the PyTorch forward."""
    def norm(x):
        n = jnp.sqrt(jnp.sum(x * x, axis=-1, keepdims=True))
        return x / jnp.maximum(n, 1e-12)

    pc, tx, im = norm(pc), norm(tx), norm(im)
    B = pc.shape[0]
    labels = jnp.arange(B)
    lpt = scale * pc @ tx.T
    lpi = scale * pc @ im.T

    def ce(logits):
        logp = jax.nn.log_softmax(logits, axis=-1)
        return -jnp.mean(logp[jnp.arange(B), labels])

    loss = (ce(lpt) + ce(lpt.T)) / 2 + (ce(lpi) + ce(lpi.T)) / 2
    acc_pt = 100.0 * jnp.sum(jnp.argmax(lpt, axis=-1) == labels) / B
    acc_pi = 100.0 * jnp.sum(jnp.argmax(lpi, axis=-1) == labels) / B
    return loss, acc_pi, acc_pt


if __name__ == "__main__":
    key = jax.random.PRNGKey(0)
    B, D = 8, 32
    k1, k2, k3 = jax.random.split(key, 3)
    pc_embed = jax.random.normal(k1, (B, D), dtype=jnp.float32)
    text_embed = jax.random.normal(k2, (B, D), dtype=jnp.float32)
    image_embed = jax.random.normal(k3, (B, D), dtype=jnp.float32)
    logit_scale = jnp.exp(jnp.float32(jnp.log(1.0 / 0.07)))  # CLIP-style scale

    res = ulip_with_image_loss(pc_embed, text_embed, image_embed, logit_scale)
    res = jax.tree_util.tree_map(jax.block_until_ready, res)

    ref_loss, ref_acc_pi, ref_acc_pt = _reference(
        pc_embed, text_embed, image_embed, logit_scale
    )
    assert jnp.allclose(res["loss"], ref_loss, rtol=1e-4, atol=1e-4), (
        res["loss"], ref_loss)
    assert jnp.allclose(res["ulip_loss"], ref_loss, rtol=1e-4, atol=1e-4)
    assert jnp.allclose(res["ulip_pc_image_acc"], ref_acc_pi, atol=1e-3)
    assert jnp.allclose(res["ulip_pc_text_acc"], ref_acc_pt, atol=1e-3)

    print("KERNEL_OK")
</pallas_src>

<mosaic_0001>
module attributes {stable_mosaic.version = 11 : i64} {
  func.func @_ulip_branch_kernel(%arg0: i32, %arg1: memref<1x1xf32, #tpu.memory_space<smem>>, %arg2: memref<8x128xf32, #tpu.memory_space<vmem>>, %arg3: memref<1x8x128xf32, #tpu.memory_space<vmem>>, %arg4: memref<1x8x128xf32, #tpu.memory_space<vmem>>) attributes {dimension_semantics = [#tpu.dimension_semantics<parallel>], iteration_bounds = array<i64: 2>, scalar_prefetch = 0 : i64, scratch_operands = 0 : i64, tpu.core_type = #tpu.core_type<tc>, window_params = [{transform_indices = @transform_0, window_bounds = array<i64: 1, 1>}, {pipeline_mode = #tpu.pipeline_mode<synchronous>, transform_indices = @transform_1, window_bounds = array<i64: 8, 128>}, {transform_indices = @transform_2, window_bounds = array<i64: 1, 8, 128>}, {transform_indices = @transform_3, window_bounds = array<i64: 1, 8, 128>}]} {
    %c0 = arith.constant 0 : index
    %c0_0 = arith.constant 0 : index
    %0 = memref.load %arg1[%c0, %c0_0] : memref<1x1xf32, #tpu.memory_space<smem>>
    %c0_1 = arith.constant 0 : index
    %c0_2 = arith.constant 0 : index
    %1 = vector.load %arg2[%c0_1, %c0_2] : memref<8x128xf32, #tpu.memory_space<vmem>>, vector<8x128xf32>
    %c0_3 = arith.constant 0 : index
    %c0_4 = arith.constant 0 : index
    %c0_5 = arith.constant 0 : index
    %2 = vector.load %arg3[%c0_3, %c0_4, %c0_5] : memref<1x8x128xf32, #tpu.memory_space<vmem>>, vector<1x8x128xf32>
    %3 = vector.shape_cast %2 : vector<1x8x128xf32> to vector<8x128xf32>
    %4 = arith.mulf %1, %1 : vector<8x128xf32>
    %cst = arith.constant dense<0.000000e+00> : vector<8xf32>
    %5 = vector.multi_reduction <add>, %4, %cst [1] : vector<8x128xf32> to vector<8xf32>
    %6 = vector.shape_cast %5 : vector<8xf32> to vector<8x1xf32>
    %cst_6 = arith.constant 1.000000e-24 : f32
    %7 = vector.broadcast %cst_6 : f32 to vector<8x1xf32>
    %8 = arith.maximumf %6, %7 : vector<8x1xf32>
    %9 = math.rsqrt %8 : vector<8x1xf32>
    %10 = vector.broadcast %0 : f32 to vector<8x1xf32>
    %11 = arith.mulf %10, %9 : vector<8x1xf32>
    %12 = vector.broadcast %11 : vector<8x1xf32> to vector<8x128xf32>
    %13 = arith.mulf %1, %12 : vector<8x128xf32>
    %14 = arith.mulf %3, %3 : vector<8x128xf32>
    %cst_7 = arith.constant dense<0.000000e+00> : vector<8xf32>
    %15 = vector.multi_reduction <add>, %14, %cst_7 [1] : vector<8x128xf32> to vector<8xf32>
    %16 = vector.shape_cast %15 : vector<8xf32> to vector<8x1xf32>
    %cst_8 = arith.constant 1.000000e-24 : f32
    %17 = vector.broadcast %cst_8 : f32 to vector<8x1xf32>
    %18 = arith.maximumf %16, %17 : vector<8x1xf32>
    %19 = math.rsqrt %18 : vector<8x1xf32>
    %20 = vector.broadcast %19 : vector<8x1xf32> to vector<8x128xf32>
    %21 = arith.mulf %3, %20 : vector<8x128xf32>
    %22 = tpu.iota {dimensions = array<i32: 0>} : vector<8x1xi32>
    %23 = tpu.iota {dimensions = array<i32: 1>} : vector<1x8xi32>
    %24 = vector.broadcast %22 : vector<8x1xi32> to vector<8x8xi32>
    %25 = vector.broadcast %23 : vector<1x8xi32> to vector<8x8xi32>
    %26 = arith.cmpi eq, %24, %25 : vector<8x8xi32>
    %cst_9 = arith.constant dense<0.000000e+00> : vector<8x8xf32>
    %27 = tpu.matmul %13, %21, %cst_9 {dimension_numbers = #tpu.dot_dimension_numbers<[1], [1], [0], [0], [0, 0, 1, 0], [], []>} : vector<8x128xf32>, vector<8x128xf32>, vector<8x8xf32> -> vector<8x8xf32>
    %cst_10 = arith.constant 0.000000e+00 : f32
    %28 = vector.broadcast %cst_10 : f32 to vector<8x8xf32>
    %29 = arith.select %26, %27, %28 : vector<8x8xi1>, vector<8x8xf32>
    %cst_11 = arith.constant dense<0.000000e+00> : vector<8xf32>
    %30 = vector.multi_reduction <add>, %29, %cst_11 [1] : vector<8x8xf32> to vector<8xf32>
    %31 = vector.shape_cast %30 : vector<8xf32> to vector<8x1xf32>
    %cst_12 = arith.constant dense<0xFF800000> : vector<8xf32>
    %32 = vector.multi_reduction <maximumf>, %27, %cst_12 [1] : vector<8x8xf32> to vector<8xf32>
    %33 = vector.shape_cast %32 : vector<8xf32> to vector<8x1xf32>
    %34 = vector.broadcast %33 : vector<8x1xf32> to vector<8x8xf32>
    %35 = arith.subf %27, %34 : vector<8x8xf32>
    %36 = math.exp %35 : vector<8x8xf32>
    %cst_13 = arith.constant dense<0.000000e+00> : vector<8xf32>
    %37 = vector.multi_reduction <add>, %36, %cst_13 [1] : vector<8x8xf32> to vector<8xf32>
    %38 = vector.shape_cast %37 : vector<8xf32> to vector<8x1xf32>
    %39 = math.log %38 : vector<8x1xf32>
    %40 = arith.addf %33, %39 : vector<8x1xf32>
    %41 = arith.subf %40, %31 : vector<8x1xf32>
    %42 = vector.shape_cast %41 : vector<8x1xf32> to vector<1x8x1xf32>
    %cst_14 = arith.constant dense<0.000000e+00> : vector<1xf32>
    %43 = vector.multi_reduction <add>, %42, %cst_14 [1, 2] : vector<1x8x1xf32> to vector<1xf32>
    %44 = vector.shape_cast %43 : vector<1xf32> to vector<1x1x1xf32>
    %45 = vector.extract %44[0, 0, 0] : f32 from vector<1x1x1xf32>
    %cst_15 = arith.constant 1.250000e-01 : f32
    %46 = arith.mulf %45, %cst_15 : f32
    %47 = arith.cmpf oge, %31, %33 : vector<8x1xf32>
    %48 = arith.extui %47 : vector<8x1xi1> to vector<8x1xi32>
    %49 = arith.sitofp %48 : vector<8x1xi32> to vector<8x1xf32>
    %50 = vector.shape_cast %49 : vector<8x1xf32> to vector<1x8x1xf32>
    %cst_16 = arith.constant dense<0.000000e+00> : vector<1xf32>
    %51 = vector.multi_reduction <add>, %50, %cst_16 [1, 2] : vector<1x8x1xf32> to vector<1xf32>
    %52 = vector.shape_cast %51 : vector<1xf32> to vector<1x1x1xf32>
    %53 = vector.extract %52[0, 0, 0] : f32 from vector<1x1x1xf32>
    %cst_17 = arith.constant 1.000000e+02 : f32
    %54 = arith.mulf %cst_17, %53 : f32
    %cst_18 = arith.constant 1.250000e-01 : f32
    %55 = arith.mulf %54, %cst_18 : f32
    %cst_19 = arith.constant dense<0.000000e+00> : vector<8x8xf32>
    %56 = tpu.matmul %21, %13, %cst_19 {dimension_numbers = #tpu.dot_dimension_numbers<[1], [1], [0], [0], [0, 0, 1, 0], [], []>} : vector<8x128xf32>, vector<8x128xf32>, vector<8x8xf32> -> vector<8x8xf32>
    %cst_20 = arith.constant dense<0xFF800000> : vector<8xf32>
    %57 = vector.multi_reduction <maximumf>, %56, %cst_20 [1] : vector<8x8xf32> to vector<8xf32>
    %58 = vector.shape_cast %57 : vector<8xf32> to vector<8x1xf32>
    %59 = vector.broadcast %58 : vector<8x1xf32> to vector<8x8xf32>
    %60 = arith.subf %56, %59 : vector<8x8xf32>
    %61 = math.exp %60 : vector<8x8xf32>
    %cst_21 = arith.constant dense<0.000000e+00> : vector<8xf32>
    %62 = vector.multi_reduction <add>, %61, %cst_21 [1] : vector<8x8xf32> to vector<8xf32>
    %63 = vector.shape_cast %62 : vector<8xf32> to vector<8x1xf32>
    %64 = math.log %63 : vector<8x1xf32>
    %65 = arith.addf %58, %64 : vector<8x1xf32>
    %66 = arith.subf %65, %31 : vector<8x1xf32>
    %67 = vector.shape_cast %66 : vector<8x1xf32> to vector<1x8x1xf32>
    %cst_22 = arith.constant dense<0.000000e+00> : vector<1xf32>
    %68 = vector.multi_reduction <add>, %67, %cst_22 [1, 2] : vector<1x8x1xf32> to vector<1xf32>
    %69 = vector.shape_cast %68 : vector<1xf32> to vector<1x1x1xf32>
    %70 = vector.extract %69[0, 0, 0] : f32 from vector<1x1x1xf32>
    %cst_23 = arith.constant 1.250000e-01 : f32
    %71 = arith.mulf %70, %cst_23 : f32
    %72 = arith.addf %46, %71 : f32
    %cst_24 = arith.constant 5.000000e-01 : f32
    %73 = arith.mulf %cst_24, %72 : f32
    %74 = tpu.iota {dimensions = array<i32: 1>} : vector<8x128xi32>
    %75 = tpu.iota {dimensions = array<i32: 0>} : vector<8x128xi32>
    %c0_i32 = arith.constant 0 : i32
    %76 = vector.broadcast %c0_i32 : i32 to vector<8x128xi32>
    %77 = arith.cmpi eq, %75, %76 : vector<8x128xi32>
    %c0_i32_25 = arith.constant 0 : i32
    %78 = vector.broadcast %c0_i32_25 : i32 to vector<8x128xi32>
    %79 = arith.cmpi eq, %74, %78 : vector<8x128xi32>
    %80 = arith.andi %77, %79 : vector<8x128xi1>
    %cst_26 = arith.constant 0.000000e+00 : f32
    %81 = vector.broadcast %73 : f32 to vector<8x128xf32>
    %82 = vector.broadcast %cst_26 : f32 to vector<8x128xf32>
    %83 = arith.select %80, %81, %82 : vector<8x128xi1>, vector<8x128xf32>
    %c1_i32 = arith.constant 1 : i32
    %84 = vector.broadcast %c1_i32 : i32 to vector<8x128xi32>
    %85 = arith.cmpi eq, %74, %84 : vector<8x128xi32>
    %86 = arith.andi %77, %85 : vector<8x128xi1>
    %87 = vector.broadcast %55 : f32 to vector<8x128xf32>
    %88 = arith.select %86, %87, %83 : vector<8x128xi1>, vector<8x128xf32>
    %c0_27 = arith.constant 0 : index
    %c0_28 = arith.constant 0 : index
    %c0_29 = arith.constant 0 : index
    %89 = vector.load %arg4[%c0_27, %c0_28, %c0_29] : memref<1x8x128xf32, #tpu.memory_space<vmem>>, vector<1x8x128xf32>
    %90 = vector.shape_cast %89 : vector<1x8x128xf32> to vector<8x128xf32>
    %91 = vector.shape_cast %88 : vector<8x128xf32> to vector<1x8x128xf32>
    tpu.vector_store %arg4[%c0_27, %c0_28, %c0_29], %91 {strides = array<i32>} : memref<1x8x128xf32, #tpu.memory_space<vmem>>, vector<1x8x128xf32>,
    return
  }
  func.func @transform_0(%arg0: i32) -> (i32, i32) {
    %c0_i32 = arith.constant 0 : i32
    %c0_i32_0 = arith.constant 0 : i32
    %c0_i32_1 = arith.constant 0 : i32
    return %c0_i32, %c0_i32_0 : i32, i32
  }
  func.func @transform_1(%arg0: i32) -> (i32, i32) {
    %c0_i32 = arith.constant 0 : i32
    %c0_i32_0 = arith.constant 0 : i32
    %c0_i32_1 = arith.constant 0 : i32
    return %c0_i32, %c0_i32_0 : i32, i32
  }
  func.func @transform_2(%arg0: i32) -> (i32, i32, i32) {
    %c0_i32 = arith.constant 0 : i32
    %c0_i32_0 = arith.constant 0 : i32
    %c0_i32_1 = arith.constant 0 : i32
    return %arg0, %c0_i32, %c0_i32_0 : i32, i32, i32
  }
  func.func @transform_3(%arg0: i32) -> (i32, i32, i32) {
    %c0_i32 = arith.constant 0 : i32
    %c0_i32_0 = arith.constant 0 : i32
    %c0_i32_1 = arith.constant 0 : i32
    return %arg0, %c0_i32, %c0_i32_0 : i32, i32, i32
  }
}

</mosaic_0001>

<llo_original>
// kernel: tpu_custom_call.1
$region0: #{tpu_custom_call.1}
  #allocation0 [shape = 'u32[]', space=smem, size = 0x4, offset = 0x4, fixed_abs, tag = 'smem constant byte address 0x4 - core index']
  #allocation1 [shape = 'u32[144,128]{1,0:T(1,128)}', space=vmem, size = 0x12000, scoped, tag = 'internal scratch']
  #allocation2 [shape = 'f32[1,1]{1,0:T(1,128)S(6)}', space=smem, size = 0x200, scoped, tag = 'scoped memory for tpu_custom_call.1']
  %s0 = inlined_call_operand.<no memory space> [shape: f32[1,1], index: 0, kind: input, shape index: {}]
  %s1 = inlined_call_operand.hbm [shape: f32[8,128], index: 1, kind: input, shape index: {}]
  %s2 = inlined_call_operand.hbm [shape: f32[2,8,128], index: 2, kind: input, shape index: {}]
  %s3 = inlined_call_operand.hbm [shape: f32[2,8,128], index: 3, kind: output, shape index: {}]
  %s4 = sld [smem:[#allocation0]]
  $region53: #{tpu_custom_call.1} parent=0
    _
  %s6 = ssub.s32 1, %s4
  %s7 = scalar_select 0, %s6, %s4
  %8 = sst [smem:[#allocation2]] %s0
  $region1: #{tpu_custom_call.1} parent=0
    #allocation3 [shape = 'u8[4096]{0}', space=vmem, size = 0x1000, scoped, tag = 'input window, operand 1, single buffered']
    #allocation4 [shape = 's32[2]{0}', space=sflag, size = 0x8, scoped, tag = 'scoped memory for tpu_custom_call.1']
    #allocation5 [shape = 's32[2]{0}', space=sflag, size = 0x8, scoped, tag = 'scoped memory for tpu_custom_call.1']
    #allocation6 [shape = 'u8[8192]{0}', space=vmem, size = 0x2000, scoped, tag = 'input window, operand 2']
    #allocation7 [shape = 's32[2]{0}', space=sflag, size = 0x8, scoped, tag = 'scoped memory for tpu_custom_call.1']
    #allocation8 [shape = 'u8[8192]{0}', space=vmem, size = 0x2000, scoped, tag = 'output window, operand 0']
    %9 = vsyncpa [#allocation4], 0
    %10 = vsyncpa [#allocation7], 0
    %s11 = scalar_lea.sflag [#allocation7], 1
    %12 = vsyncpa %s11, 0
    %13 = vsyncpa [#allocation5], 0
    %s14 = scalar_lea.sflag [#allocation5], 1
    %15 = vsyncpa %s14, 0
    loop: start=0, step=1, limit=4
    $region2: #{tpu_custom_call.1} parent=1 // loop_pre_header
      _
    $region3: #{tpu_custom_call.1} parent=1 // loop_header
      %s17 = sphi 0, %s21
      %p18 = scmp.ge.s32.totalorder %s17, 4
      %s25 = sphi 0, %s25
      %s27 = sphi 0, %s25
      %s28 = sphi 0, %s27
      %s42 = sphi 0, %s28
      %s46 = sphi 0, %s46
      %s48 = sphi 0, %s46
      %s49 = sphi 0, %s48
      %s63 = sphi 0, %s49
      %s69 = sphi 0, %s71
      %s72 = sphi 0, %s69
      %s73 = sphi 0, %s72
      %s89 = sphi 0, %s73
      %s95 = sphi 0, %s97
      %s98 = sphi 0, %s95
      %s99 = sphi 0, %s98
      %s115 = sphi 0, %s99
    $region4: #{tpu_custom_call.1} parent=1 // loop_header_branch
      %20 = sbr.rel (%p18) target = $region8
    $region5: #{tpu_custom_call.1} parent=1 // loop_body
      %s22 = ssub.s32 %s17, 1
      %s23 = ssub.s32 %s17, 2
      %s24 = sadd.s32 %s17, 1
      %s26 = sadd.s32 %s25, 1
      %p29 = scmp.eq.s32.totalorder %s17, 1
      %p30 = scmp.ne.s32.totalorder %s25, %s27
      %p31 = scmp.eq.s32.totalorder %s17, 0
      %p32 = por %p30, %p31
      %p33 = scmp.ne.s32.totalorder %s25, %s27
      %p34 = scmp.eq.s32.totalorder %s22, 1
      %p35 = por %p33, %p34
      %p36 = scmp.ne.s32.totalorder %s27, %s28
      %p37 = scmp.eq.s32.totalorder %s22, 0
      %p38 = por %p36, %p37
      %p39 = scmp.ne.s32.totalorder %s27, %s28
      %p40 = scmp.eq.s32.totalorder %s23, 1
      %p41 = por %p39, %p40
      %p43 = scmp.ne.s32.totalorder %s28, %s42
      %p44 = scmp.eq.s32.totalorder %s23, 0
      %p45 = por %p43, %p44
      %s47 = sadd.s32 %s46, 1
      %p50 = scmp.eq.s32.totalorder %s17, 1
      %p51 = scmp.ne.s32.totalorder %s46, %s48
      %p52 = scmp.eq.s32.totalorder %s17, 0
      %p53 = por %p51, %p52
      %p54 = scmp.ne.s32.totalorder %s46, %s48
      %p55 = scmp.eq.s32.totalorder %s22, 1
      %p56 = por %p54, %p55
      %p57 = scmp.ne.s32.totalorder %s48, %s49
      %p58 = scmp.eq.s32.totalorder %s22, 0
      %p59 = por %p57, %p58
      %p60 = scmp.ne.s32.totalorder %s48, %s49
      %p61 = scmp.eq.s32.totalorder %s23, 1
      %p62 = por %p60, %p61
      %p64 = scmp.ne.s32.totalorder %s49, %s63
      %p65 = scmp.eq.s32.totalorder %s23, 0
      %p66 = por %p64, %p65
      %s67 = ssub.s32 %s17, %s24
      %p68 = scmp.eq.s32.totalorder %s67, 0
      %s70 = sadd.s32 %s69, 1
      %s71 = scalar_select %p68, %s69, %s70
      %p74 = pneg %p68
      %p75 = scmp.eq.s32.totalorder %s17, 1
      %p76 = por %p74, %p75
      %p77 = scmp.ne.s32.totalorder %s69, %s72
      %p78 = scmp.eq.s32.totalorder %s17, 0
      %p79 = por %p77, %p78
      %p80 = scmp.ne.s32.totalorder %s69, %s72
      %p81 = scmp.eq.s32.totalorder %s22, 1
      %p82 = por %p80, %p81
      %p83 = scmp.ne.s32.totalorder %s72, %s73
      %p84 = scmp.eq.s32.totalorder %s22, 0
      %p85 = por %p83, %p84
      %p86 = scmp.ne.s32.totalorder %s72, %s73
      %p87 = scmp.eq.s32.totalorder %s23, 1
      %p88 = por %p86, %p87
      %p90 = scmp.ne.s32.totalorder %s73, %s89
      %p91 = scmp.eq.s32.totalorder %s23, 0
      %p92 = por %p90, %p91
      %s93 = ssub.s32 %s17, %s24
      %p94 = scmp.eq.s32.totalorder %s93, 0
      %s96 = sadd.s32 %s95, 1
      %s97 = scalar_select %p94, %s95, %s96
      %p100 = pneg %p94
      %p101 = scmp.eq.s32.totalorder %s17, 1
      %p102 = por %p100, %p101
      %p103 = scmp.ne.s32.totalorder %s95, %s98
      %p104 = scmp.eq.s32.totalorder %s17, 0
      %p105 = por %p103, %p104
      %p106 = scmp.ne.s32.totalorder %s95, %s98
      %p107 = scmp.eq.s32.totalorder %s22, 1
      %p108 = por %p106, %p107
      %p109 = scmp.ne.s32.totalorder %s98, %s99
      %p110 = scmp.eq.s32.totalorder %s22, 0
      %p111 = por %p109, %p110
      %p112 = scmp.ne.s32.totalorder %s98, %s99
      %p113 = scmp.eq.s32.totalorder %s23, 1
      %p114 = por %p112, %p113
      %p116 = scmp.ne.s32.totalorder %s99, %s115
      %p117 = scmp.eq.s32.totalorder %s23, 0
      %p118 = por %p116, %p117
      %p119 = scmp.le.s32.totalorder 1, %s17
      %p120 = scmp.lt.s32.totalorder %s17, 3
      %p121 = pnand %p119, %p120
      %p122 = pneg %p121
      // Predicated region
      $region9: #{tpu_custom_call.1} parent=5 // pred_check
        _
      $region10: #{tpu_custom_call.1} parent=5 // pred_check_branch
        %124 = sbr.rel (%p121) target = $region12
      $region11: #{tpu_custom_call.1} parent=5 // pred_region
        %s125 = ssub.s32 %s17, 1
        // Predicated region
        $region13: #{tpu_custom_call.1} parent=11 // pred_check
          %p126 = pneg %p38
        $region14: #{tpu_custom_call.1} parent=11 // pred_check_branch
          %128 = sbr.rel (%p126) target = $region16
        $region15: #{tpu_custom_call.1} parent=11 // pred_region
          _
        $region16: #{tpu_custom_call.1} parent=11 // pred_fallthru
          _
        // Predicated region
        $region17: #{tpu_custom_call.1} parent=11 // pred_check
          %p129 = pneg %p59
        $region18: #{tpu_custom_call.1} parent=11 // pred_check_branch
          %131 = sbr.rel (%p129) target = $region20
        $region19: #{tpu_custom_call.1} parent=11 // pred_region
          %s133 = ssub.s32 128, 128
          %134 = vsyncadd [#allocation4], %s133
          %s136 = sshll.u32 [#allocation3], 4
          %s137 = int_to_ptr.vmem [resolvable:$true] %s136
          %139 = dma.hbm_to_vmem [thread:$0]  %s1, 128, %s137, [#allocation4]
        $region20: #{tpu_custom_call.1} parent=11 // pred_fallthru
          _
      $region12: #{tpu_custom_call.1} parent=5 // pred_fallthru
        _
      %p140 = scmp.lt.s32.totalorder %s17, 2
      // Predicated region
      $region21: #{tpu_custom_call.1} parent=5 // pred_check
        %p141 = pneg %p140
      $region22: #{tpu_custom_call.1} parent=5 // pred_check_branch
        %143 = sbr.rel (%p141) target = $region24
      $region23: #{tpu_custom_call.1} parent=5 // pred_region
        // Predicated region
        $region25: #{tpu_custom_call.1} parent=23 // pred_check
          %p144 = pneg %p79
        $region26: #{tpu_custom_call.1} parent=23 // pred_check_branch
          %146 = sbr.rel (%p144) target = $region28
        $region27: #{tpu_custom_call.1} parent=23 // pred_region
          %s147 = sand.u32 %s69, 1
          %s148 = scalar_lea.sflag [#allocation7], %s147
          %s149 = sand.u32 %s69, 1
          %s150 = smul.addr %s149, 8
          %s151 = scalar_lea.vmem [#allocation6], %s150
          %s153 = ssub.s32 128, 128
          %154 = vsyncadd %s148, %s153
          %s155 = smul.addr %s17, 128
          %s156 = scalar_lea.hbm %s2, %s155
          %s158 = sshll.u32 %s151, 4
          %s159 = int_to_ptr.vmem [resolvable:$true] %s158
          %161 = dma.hbm_to_vmem [thread:$0]  %s156, 128, %s159, %s148
        $region28: #{tpu_custom_call.1} parent=23 // pred_fallthru
          _
      $region24: #{tpu_custom_call.1} parent=5 // pred_fallthru
        _
      %p162 = scmp.le.s32.totalorder 1, %s17
      %p163 = scmp.lt.s32.totalorder %s17, 3
      %p164 = pnand %p162, %p163
      %p165 = pneg %p164
      // Predicated region
      $region29: #{tpu_custom_call.1} parent=5 // pred_check
        _
      $region30: #{tpu_custom_call.1} parent=5 // pred_check_branch
        %167 = sbr.rel (%p164) target = $region32
      $region31: #{tpu_custom_call.1} parent=5 // pred_region
        %s168 = ssub.s32 %s17, 1
        // Predicated region
        $region33: #{tpu_custom_call.1} parent=31 // pred_check
          %p169 = pneg %p59
        $region34: #{tpu_custom_call.1} parent=31 // pred_check_branch
          %171 = sbr.rel (%p169) target = $region36
        $region35: #{tpu_custom_call.1} parent=31 // pred_region
          %172 = dma.done [#allocation4], 128
        $region36: #{tpu_custom_call.1} parent=31 // pred_fallthru
          _
        %s173 = sand.u32 %s72, 1
        %s174 = scalar_lea.sflag [#allocation7], %s173
        %s175 = sand.u32 %s72, 1
        %s176 = smul.addr %s175, 8
        %s177 = scalar_lea.vmem [#allocation6], %s176
        // Predicated region
        $region37: #{tpu_custom_call.1} parent=31 // pred_check
          %p178 = pneg %p85
        $region38: #{tpu_custom_call.1} parent=31 // pred_check_branch
          %180 = sbr.rel (%p178) target = $region40
        $region39: #{tpu_custom_call.1} parent=31 // pred_region
          %181 = dma.done %s174, 128
        $region40: #{tpu_custom_call.1} parent=31 // pred_fallthru
          _
        %p182 = pneg %p38
        %p183 = pneg %p35
        %p184 = pneg %p59
        %p185 = pneg %p56
        %s186 = sand.u32 %s72, 1
        %s187 = scalar_lea.sflag [#allocation7], %s186
        %s188 = sand.u32 %s72, 1
        %s189 = smul.addr %s188, 8
        %s190 = scalar_lea.vmem [#allocation6], %s189
        %p191 = pneg %p85
        %p192 = pneg %p82
        %p193 = pneg %p111
        %p194 = pneg %p108
        %s195 = sand.u32 %s98, 1
        %s196 = scalar_lea.sflag [#allocation5], %s195
        %s197 = sand.u32 %s98, 1
        %s198 = smul.addr %s197, 8
        %s199 = scalar_lea.vmem [#allocation8], %s198
        %s200 = sld [smem:[#allocation2]]
        %v201 = vld [vmem:[#allocation3] sm:$0xff]
        %v202 = vld [vmem:[%s177] sm:$0xff]
        %v203 = vmul.f32 %v201, %v201
        %204 = vadd.xlane.f32.xlu0 %v203
        %v205 = vpop.xlane.xlu0 %204
        %v206 = vmax.f32 %v205, 1e-24
        %v207 = vrsqrt.pop %v206
        %v208 = vstv %s200
        %v209 = vmul.f32 %v208, %v207
        %v210 = vmul.f32 %v201, %v209
        %v211 = vmul.f32 %v202, %v202
        %212 = vadd.xlane.f32.xlu0 %v211
        %v213 = vpop.xlane.xlu0 %212
        %v214 = vmax.f32 %v213, 1e-24
        %v215 = vrsqrt.pop %v214
        %v216 = vmul.f32 %v202, %v215
        %v217 = vlaneseq
        %v218 = vshrl.u32 %v217, 7
        %v219 = vlaneseq
        %v220 = vand.u32 %v219, 127
        %vm221 = vcmp.eq.s32.totalorder %v218, %v220
        %222 = vmatprep.subr.mxu0 0.0
        %223 = vmatpush1.xpose.msra.mxu0 0.0
        %224 = vmatprep.subr.mxu0 0.0
        %225 = vmatpush1.xpose.msra.mxu0 0.0
        %226 = vmatprep.subr.mxu0 0.0
        %227 = vmatpush1.xpose.msra.mxu0 0.0
        %228 = vmatprep.subr.mxu0 0.0
        %229 = vmatpush1.xpose.msra.mxu0 0.0
        %230 = vmatprep.subr.mxu0 0.0
        %231 = vmatpush1.xpose.msra.mxu0 0.0
        %232 = vmatprep.subr.mxu0 0.0
        %233 = vmatpush1.xpose.msra.mxu0 0.0
        %234 = vmatprep.subr.mxu0 0.0
        %235 = vmatpush1.xpose.msra.mxu0 0.0
        %236 = vmatprep.subr.mxu0 0.0
        %237 = vmatpush1.xpose.msra.mxu0 0.0
        %238 = vmatprep.subr.mxu0 0.0
        %239 = vmatpush1.xpose.msra.mxu0 0.0
        %240 = vmatprep.subr.mxu0 0.0
        %241 = vmatpush1.xpose.msra.mxu0 0.0
        %242 = vmatprep.subr.mxu0 0.0
        %243 = vmatpush1.xpose.msra.mxu0 0.0
        %244 = vmatprep.subr.mxu0 0.0
        %245 = vmatpush1.xpose.msra.mxu0 0.0
        %246 = vmatprep.subr.mxu0 0.0
        %247 = vmatpush1.xpose.msra.mxu0 0.0
        %248 = vmatprep.subr.mxu0 0.0
        %249 = vmatpush1.xpose.msra.mxu0 0.0
        %250 = vmatprep.subr.mxu0 0.0
        %251 = vmatpush1.xpose.msra.mxu0 0.0
        %252 = vmatprep.subr.mxu0 0.0
        %253 = vmatpush1.xpose.msra.mxu0 %v216
        %254 = vmatprep.subr.mxu0 0.0
        %255 = vmatpush2.xpose.msra.mxu0 0.0
        %256 = vmatprep.subr.mxu0 0.0
        %257 = vmatpush2.xpose.msra.mxu0 0.0
        %258 = vmatprep.subr.mxu0 0.0
        %259 = vmatpush2.xpose.msra.mxu0 0.0
        %260 = vmatprep.subr.mxu0 0.0
        %261 = vmatpush2.xpose.msra.mxu0 0.0
        %262 = vmatprep.subr.mxu0 0.0
        %263 = vmatpush2.xpose.msra.mxu0 0.0
        %264 = vmatprep.subr.mxu0 0.0
        %265 = vmatpush2.xpose.msra.mxu0 0.0
        %266 = vmatprep.subr.mxu0 0.0
        %267 = vmatpush2.xpose.msra.mxu0 0.0
        %268 = vmatprep.subr.mxu0 0.0
        %269 = vmatpush2.xpose.msra.mxu0 0.0
        %270 = vmatprep.subr.mxu0 0.0
        %271 = vmatpush2.xpose.msra.mxu0 0.0
        %272 = vmatprep.subr.mxu0 0.0
        %273 = vmatpush2.xpose.msra.mxu0 0.0
        %274 = vmatprep.subr.mxu0 0.0
        %275 = vmatpush2.xpose.msra.mxu0 0.0
        %276 = vmatprep.subr.mxu0 0.0
        %277 = vmatpush2.xpose.msra.mxu0 0.0
        %278 = vmatprep.subr.mxu0 0.0
        %279 = vmatpush2.xpose.msra.mxu0 0.0
        %280 = vmatprep.subr.mxu0 0.0
        %281 = vmatpush2.xpose.msra.mxu0 0.0
        %282 = vmatprep.subr.mxu0 0.0
        %283 = vmatpush2.xpose.msra.mxu0 0.0
        %284 = vmatprep.subr.mxu0 0.0
        %285 = vmatpush2.xpose.msra.mxu0 0.0
        %286 = vmatprep.mubr.f32.mxu0 0.0
        %287 = vmatmul.mubr.f32.gmra.mxu0 %v210
        %v288 = vpop.f32.mrf.mxu0
        %v289 = vadd.f32 0.0, %v288
        %v290 = vpop.f32.mrf.mxu0
        %291 = vdwg.mxu0
        %v292 = vsel %vm221, %v289, 0.0
        %vm293 = vcmask 64512
        %v294 = vsel %vm293, %v292, 0.0
        %295 = vadd.xlane.f32.xlu0 %v294
        %v296 = vpop.xlane.xlu0 %295
        %v297 = vsel %vm293, %v289, -inf
        %298 = vmax.xlane.f32.xlu0 %v297
        %v299 = vpop.xlane.xlu0 %298
        %v300 = vsub.f32 %v289, %v299
        %v301 = vmul.f32 %v300, 1.442695
        %v302 = vpow.pop %v301
        %v303 = vsel %vm293, %v302, 0.0
        %304 = vadd.xlane.f32.xlu0 %v303
        %v305 = vpop.xlane.xlu0 %304
        %v306 = vlog2.pop %v305
        %v307 = vmul.f32 %v306, 0.6931472
        %v308 = vadd.f32 %v299, %v307
        %v309 = vsub.f32 %v308, %v296
        %vm310 = vcmask 7168
        %v311 = vsel %vm310, %v309, 0.0
        %312 = vadd.xlane.f32.xlu0 %v311
        %v313 = vpop.xlane.xlu0 %312
        %v314 = vrot.slane %v313, 4
        %v315 = vadd.f32 %v313, %v314
        %v316 = vrot.slane %v315, 2
        %v317 = vadd.f32 %v315, %v316
        %v318 = vrot.slane %v317, 1
        %v319 = vadd.f32 %v317, %v318
        %s320 = vtos %v319
        %s321 = smul.f32 %s320, 0.125
        %vm322 = vcmp.ge.f32.partialorder %v296, %v299
        %v323 = vsel %vm322, 1, 0
        %v324 = vcvt.s32.f32 %v323
        %v325 = vsel %vm310, %v324, 0.0
        %326 = vadd.xlane.f32.xlu0 %v325
        %v327 = vpop.xlane.xlu0 %326
        %v328 = vrot.slane %v327, 4
        %v329 = vadd.f32 %v327, %v328
        %v330 = vrot.slane %v329, 2
        %v331 = vadd.f32 %v329, %v330
        %v332 = vrot.slane %v331, 1
        %v333 = vadd.f32 %v331, %v332
        %s334 = vtos %v333
        %s335 = smul.f32 %s334, 100.0
        %s336 = smul.f32 %s335, 0.125
        %337 = vmatprep.subr.mxu0 0.0
        %338 = vmatpush1.xpose.msra.mxu0 0.0
        %339 = vmatprep.subr.mxu0 0.0
        %340 = vmatpush1.xpose.msra.mxu0 0.0
        %341 = vmatprep.subr.mxu0 0.0
        %342 = vmatpush1.xpose.msra.mxu0 0.0
        %343 = vmatprep.subr.mxu0 0.0
        %344 = vmatpush1.xpose.msra.mxu0 0.0
        %345 = vmatprep.subr.mxu0 0.0
        %346 = vmatpush1.xpose.msra.mxu0 0.0
        %347 = vmatprep.subr.mxu0 0.0
        %348 = vmatpush1.xpose.msra.mxu0 0.0
        %349 = vmatprep.subr.mxu0 0.0
        %350 = vmatpush1.xpose.msra.mxu0 0.0
        %351 = vmatprep.subr.mxu0 0.0
        %352 = vmatpush1.xpose.msra.mxu0 0.0
        %353 = vmatprep.subr.mxu0 0.0
        %354 = vmatpush1.xpose.msra.mxu0 0.0
        %355 = vmatprep.subr.mxu0 0.0
        %356 = vmatpush1.xpose.msra.mxu0 0.0
        %357 = vmatprep.subr.mxu0 0.0
        %358 = vmatpush1.xpose.msra.mxu0 0.0
        %359 = vmatprep.subr.mxu0 0.0
        %360 = vmatpush1.xpose.msra.mxu0 0.0
        %361 = vmatprep.subr.mxu0 0.0
        %362 = vmatpush1.xpose.msra.mxu0 0.0
        %363 = vmatprep.subr.mxu0 0.0
        %364 = vmatpush1.xpose.msra.mxu0 0.0
        %365 = vmatprep.subr.mxu0 0.0
        %366 = vmatpush1.xpose.msra.mxu0 0.0
        %367 = vmatprep.subr.mxu0 0.0
        %368 = vmatpush1.xpose.msra.mxu0 %v210
        %369 = vmatprep.subr.mxu0 0.0
        %370 = vmatpush2.xpose.msra.mxu0 0.0
        %371 = vmatprep.subr.mxu0 0.0
        %372 = vmatpush2.xpose.msra.mxu0 0.0
        %373 = vmatprep.subr.mxu0 0.0
        %374 = vmatpush2.xpose.msra.mxu0 0.0
        %375 = vmatprep.subr.mxu0 0.0
        %376 = vmatpush2.xpose.msra.mxu0 0.0
        %377 = vmatprep.subr.mxu0 0.0
        %378 = vmatpush2.xpose.msra.mxu0 0.0
        %379 = vmatprep.subr.mxu0 0.0
        %380 = vmatpush2.xpose.msra.mxu0 0.0
        %381 = vmatprep.subr.mxu0 0.0
        %382 = vmatpush2.xpose.msra.mxu0 0.0
        %383 = vmatprep.subr.mxu0 0.0
        %384 = vmatpush2.xpose.msra.mxu0 0.0
        %385 = vmatprep.subr.mxu0 0.0
        %386 = vmatpush2.xpose.msra.mxu0 0.0
        %387 = vmatprep.subr.mxu0 0.0
        %388 = vmatpush2.xpose.msra.mxu0 0.0
        %389 = vmatprep.subr.mxu0 0.0
        %390 = vmatpush2.xpose.msra.mxu0 0.0
        %391 = vmatprep.subr.mxu0 0.0
        %392 = vmatpush2.xpose.msra.mxu0 0.0
        %393 = vmatprep.subr.mxu0 0.0
        %394 = vmatpush2.xpose.msra.mxu0 0.0
        %395 = vmatprep.subr.mxu0 0.0
        %396 = vmatpush2.xpose.msra.mxu0 0.0
        %397 = vmatprep.subr.mxu0 0.0
        %398 = vmatpush2.xpose.msra.mxu0 0.0
        %399 = vmatprep.subr.mxu0 0.0
        %400 = vmatpush2.xpose.msra.mxu0 0.0
        %401 = vmatprep.mubr.f32.mxu0 0.0
        %402 = vmatmul.mubr.f32.gmra.mxu0 %v216
        %v403 = vpop.f32.mrf.mxu0
        %v404 = vadd.f32 0.0, %v403
        %v405 = vpop.f32.mrf.mxu0
        %406 = vdwg.mxu0
        %v407 = vsel %vm293, %v404, -inf
        %408 = vmax.xlane.f32.xlu0 %v407
        %v409 = vpop.xlane.xlu0 %408
        %v410 = vsub.f32 %v404, %v409
        %v411 = vmul.f32 %v410, 1.442695
        %v412 = vpow.pop %v411
        %v413 = vsel %vm293, %v412, 0.0
        %414 = vadd.xlane.f32.xlu0 %v413
        %v415 = vpop.xlane.xlu0 %414
        %v416 = vlog2.pop %v415
        %v417 = vmul.f32 %v416, 0.6931472
        %v418 = vadd.f32 %v409, %v417
        %v419 = vsub.f32 %v418, %v296
        %v420 = vsel %vm310, %v419, 0.0
        %421 = vadd.xlane.f32.xlu0 %v420
        %v422 = vpop.xlane.xlu0 %421
        %v423 = vrot.slane %v422, 4
        %v424 = vadd.f32 %v422, %v423
        %v425 = vrot.slane %v424, 2
        %v426 = vadd.f32 %v424, %v425
        %v427 = vrot.slane %v426, 1
        %v428 = vadd.f32 %v426, %v427
        %s429 = vtos %v428
        %s430 = smul.f32 %s429, 0.125
        %s431 = sadd.f32 %s321, %s430
        %s432 = smul.f32 %s431, 0.5
        %vm433 = vcmp.eq.s32.totalorder %v218, 0
        %vm434 = vcmp.eq.s32.totalorder %v220, 0
        %vm435 = vmand %vm433, %vm434
        %v436 = vstv %s432
        %v437 = vsel %vm435, %v436, 0.0
        %vm438 = vcmp.eq.s32.totalorder %v220, 1
        %vm439 = vmand %vm433, %vm438
        %v440 = vstv %s336
        %v441 = vsel %vm439, %v440, %v437
        %442 = vst [vmem:[%s199] sm:$0xff] %v441
        %s443 = sand.u32 %s98, 1
        %s444 = scalar_lea.sflag [#allocation5], %s443
        %s445 = sand.u32 %s98, 1
        %s446 = smul.addr %s445, 8
        %s447 = scalar_lea.vmem [#allocation8], %s446
        // Predicated region
        $region41: #{tpu_custom_call.1} parent=31 // pred_check
          %p448 = pneg %p108
        $region42: #{tpu_custom_call.1} parent=31 // pred_check_branch
          %450 = sbr.rel (%p448) target = $region44
        $region43: #{tpu_custom_call.1} parent=31 // pred_region
          %s452 = ssub.s32 128, 128
          %453 = vsyncadd %s444, %s452
          %s454 = smul.addr %s22, 128
          %s455 = scalar_lea.hbm %s3, %s454
          %s457 = sshll.u32 %s447, 4
          %s458 = int_to_ptr.vmem [resolvable:$true] %s457
          %460 = dma.vmem_to_hbm [thread:$0]  %s458, 128, %s455, %s444
        $region44: #{tpu_custom_call.1} parent=31 // pred_fallthru
          _
      $region32: #{tpu_custom_call.1} parent=5 // pred_fallthru
        _
      %p461 = scmp.le.s32.totalorder 2, %s17
      // Predicated region
      $region45: #{tpu_custom_call.1} parent=5 // pred_check
        %p462 = pneg %p461
      $region46: #{tpu_custom_call.1} parent=5 // pred_check_branch
        %464 = sbr.rel (%p462) target = $region48
      $region47: #{tpu_custom_call.1} parent=5 // pred_region
        %s465 = ssub.s32 %s17, 2
        // Predicated region
        $region49: #{tpu_custom_call.1} parent=47 // pred_check
          %p466 = pneg %p114
        $region50: #{tpu_custom_call.1} parent=47 // pred_check_branch
          %468 = sbr.rel (%p466) target = $region52
        $region51: #{tpu_custom_call.1} parent=47 // pred_region
          %s469 = sand.u32 %s99, 1
          %s470 = scalar_lea.sflag [#allocation5], %s469
          %s471 = sand.u32 %s99, 1
          %s472 = smul.addr %s471, 8
          %s473 = scalar_lea.vmem [#allocation8], %s472
          %474 = dma.done %s470, 128
        $region52: #{tpu_custom_call.1} parent=47 // pred_fallthru
          _
      $region48: #{tpu_custom_call.1} parent=5 // pred_fallthru
        _
    $region6: #{tpu_custom_call.1} parent=1 // loop_footer
      %s21 = sadd.s32 1, %s17
    $region7: #{tpu_custom_call.1} parent=1 // loop_footer_branch
      %16 = sbr.rel target = $region3
    $region8: #{tpu_custom_call.1} parent=1 // loop_exit
      _
    %475 = vsyncpa [#allocation4], 1
    %s476 = scalar_lea.sflag [#allocation4], 1
    %477 = vsyncpa %s476, 1
    %478 = vsyncpa [#allocation7], 1
    %s479 = scalar_lea.sflag [#allocation7], 1
    %480 = vsyncpa %s479, 1
    %481 = vsyncpa [#allocation5], 1
    %s482 = scalar_lea.sflag [#allocation5], 1
    %483 = vsyncpa %s482, 1

</llo_original>
